<compile_context>
chip_gen: v6e
topology: v6e:2x2x1
jax: 0.10.0
libtpu: 0.0.40
codegen_flags: <defaults>
</compile_context>

<pallas_src>
import functools

import jax
import jax.numpy as jnp
from jax import lax
from jax.experimental import pallas as pl
from jax.experimental.pallas import tpu as pltpu

SEQ = 6      # tokens per example (dense1 expects 32*6 flattened features)
EMB = 32     # embedding width
H1 = 100     # dense1 out
H2 = 10      # dense2 out
H1P = 128    # padded dense1 out
H2P = 16     # padded dense2 out (one bf16 sublane tile)


def _round_up(x, m):
    return (x + m - 1) // m * m


def _pick_batch_tile(batch, block_rows):
    """Batch tile (lane dim): multiple of 128; prefer >=2 grid steps (v7x has
    two TensorCores and the batch axis is the only parallel axis)."""
    b128 = _round_up(max(batch, 1), 128)
    tb = min(block_rows, b128)
    if b128 // tb < 2 and b128 >= 256:
        tb = _round_up((b128 + 1) // 2, 128)
    return tb


def fused_mlp_kernel(idx_ref, eall_ref, b1_ref, w2_ref, b2_ref, w3_ref, b3_ref,
                     o_ref, *, out_size, vp):
    """One batch tile, batch in lanes:
       fused one-hot-gather+dense1 (single K=SEQ*Vp matmul), dense2+ReLU,
       dense3, masked log-softmax over the class (sublane) axis."""
    tb = idx_ref.shape[1]
    viota = lax.broadcasted_iota(jnp.int32, (vp, tb), 0)

    # Concatenated transposed one-hot (SEQ*Vp, TB); values are exact 0/1.
    # TODO(synk): out-of-range token ids silently yield a zero embedding row
    # (PyTorch would raise); padded batch columns use idx=0 and are sliced off.
    parts = [
        (idx_ref[j:j + 1, :] == viota).astype(jnp.bfloat16)      # (Vp, TB)
        for j in range(SEQ)
    ]
    onehot_t = jnp.concatenate(parts, axis=0)                     # (SEQ*Vp, TB)

    # fused embedding gather + dense1:  (H1P, SEQ*Vp) @ (SEQ*Vp, TB)
    h1 = jnp.dot(eall_ref[...], onehot_t,
                 preferred_element_type=jnp.float32)              # (H1P, TB)
    h1 = jnp.maximum(h1 + b1_ref[...], 0.0)

    # dense2 + ReLU:  (H2P, H1P) @ (H1P, TB)
    h2 = jnp.dot(w2_ref[...], h1.astype(jnp.bfloat16),
                 preferred_element_type=jnp.float32)              # (H2P, TB)
    h2 = jnp.maximum(h2 + b2_ref[...], 0.0)

    # dense3:  (OUT8, H2P) @ (H2P, TB)
    z = jnp.dot(w3_ref[...], h2.astype(jnp.bfloat16),
                preferred_element_type=jnp.float32) + b3_ref[...]  # (OUT8, TB)

    # mask padded class rows, then log-softmax over the class (sublane) axis
    row = lax.broadcasted_iota(jnp.int32, z.shape, 0)
    z = jnp.where(row < out_size, z, -jnp.inf)
    m = jnp.max(z, axis=0, keepdims=True)
    s = jnp.sum(jnp.exp(z - m), axis=0, keepdims=True)
    o_ref[...] = z - (m + jnp.log(s))


def base_model_forward(x_idx, params, *, block_rows=2048):
    """x_idx: int32 (B, 6) token indices. Returns (B, output_size) log-probs."""
    emb, w1, b1, w2, b2, w3, b3 = params
    vocab = emb.shape[0]
    out_size = w3.shape[1]
    OUT8 = _round_up(out_size, 8)

    B = x_idx.shape[0]
    TB = _pick_batch_tile(B, block_rows)
    B_pad = _round_up(B, TB)
    Vp = _round_up(vocab, 64)          # keeps SEQ*Vp a multiple of 128
    K1 = SEQ * Vp

    # --- fold the embedding into dense1 (f32 math), pad, transpose, cast ---
    #   E_all[j*Vp + v, :] = emb[v] @ w1[j]
    w1_r = w1.reshape(SEQ, EMB, H1).astype(jnp.float32)
    e_blk = jnp.einsum('ve,seh->svh', emb.astype(jnp.float32), w1_r)
    e_all = jnp.zeros((SEQ, Vp, H1P), jnp.float32).at[:, :vocab, :H1].set(e_blk)
    eall_t = e_all.reshape(K1, H1P).T.astype(jnp.bfloat16)        # (H1P, K1)

    # --- transposed / padded weights & biases ---
    w2_t = jnp.zeros((H2P, H1P), jnp.bfloat16).at[:H2, :H1].set(
        w2.T.astype(jnp.bfloat16))
    w3_t = jnp.zeros((OUT8, H2P), jnp.bfloat16).at[:out_size, :H2].set(
        w3.T.astype(jnp.bfloat16))
    b1_t = jnp.zeros((H1P, 1), jnp.float32).at[:H1, 0].set(
        b1.reshape(-1).astype(jnp.float32))
    b2_t = jnp.zeros((H2P, 1), jnp.float32).at[:H2, 0].set(
        b2.reshape(-1).astype(jnp.float32))
    b3_t = jnp.zeros((OUT8, 1), jnp.float32).at[:out_size, 0].set(
        b3.reshape(-1).astype(jnp.float32))

    # indices transposed: each DMA row is TB contiguous int32
    idx_p = jnp.zeros((SEQ, B_pad), jnp.int32).at[:, :B].set(
        x_idx.T.astype(jnp.int32))

    flops_per_col = 2 * (K1 * H1P + H1P * H2P + H2P * OUT8)
    weight_bytes = 2 * (eall_t.size + w2_t.size + w3_t.size)
    cost = pl.CostEstimate(
        flops=B_pad * flops_per_col,
        transcendentals=B_pad * (OUT8 + 1),
        bytes_accessed=B_pad * (SEQ * 4 + OUT8 * 4) + weight_bytes,
    )

    kernel = functools.partial(fused_mlp_kernel, out_size=out_size, vp=Vp)

    out_t = pl.pallas_call(
        kernel,
        out_shape=jax.ShapeDtypeStruct((OUT8, B_pad), jnp.float32),
        grid=(B_pad // TB,),
        in_specs=[
            pl.BlockSpec((SEQ, TB), lambda i: (0, i)),     # indices (tiled)
            pl.BlockSpec((H1P, K1), lambda i: (0, 0)),     # folded emb+dense1
            pl.BlockSpec((H1P, 1), lambda i: (0, 0)),      # b1
            pl.BlockSpec((H2P, H1P), lambda i: (0, 0)),    # w2^T
            pl.BlockSpec((H2P, 1), lambda i: (0, 0)),      # b2
            pl.BlockSpec((OUT8, H2P), lambda i: (0, 0)),   # w3^T
            pl.BlockSpec((OUT8, 1), lambda i: (0, 0)),     # b3
        ],
        out_specs=pl.BlockSpec((OUT8, TB), lambda i: (0, i)),
        compiler_params=pltpu.CompilerParams(
            dimension_semantics=("parallel",)),
        cost_estimate=cost,
    )(idx_p, eall_t, b1_t, w2_t, b2_t, w3_t, b3_t)

    return out_t[:out_size, :B].T


def reference_forward(x_idx, params):
    """Pure-JAX f32 reference of the PyTorch module."""
    emb, w1, b1, w2, b2, w3, b3 = params
    x = jnp.take(emb, x_idx, axis=0).reshape(x_idx.shape[0], -1)
    h1 = jnp.maximum(x @ w1 + b1, 0.0)
    h2 = jnp.maximum(h1 @ w2 + b2, 0.0)
    z = h2 @ w3 + b3
    return jax.nn.log_softmax(z, axis=1)


def init_params(key, word_vocab_size, output_size):
    ks = jax.random.split(key, 7)
    emb = jax.random.normal(ks[0], (word_vocab_size, EMB), jnp.float32)
    w1 = jax.random.normal(ks[1], (EMB * SEQ, H1), jnp.float32) * 0.05
    b1 = jax.random.normal(ks[2], (H1,), jnp.float32) * 0.05
    w2 = jax.random.normal(ks[3], (H1, H2), jnp.float32) * 0.05
    b2 = jax.random.normal(ks[4], (H2,), jnp.float32) * 0.05
    w3 = jax.random.normal(ks[5], (H2, output_size), jnp.float32) * 0.05
    b3 = jax.random.normal(ks[6], (output_size,), jnp.float32) * 0.05
    return (emb, w1, b1, w2, b2, w3, b3)


if __name__ == "__main__":
    word_vocab_size = 50
    output_size = 8
    B, seq = 2, 6   # dense1 expects 32*6 flattened features -> seq length is 6

    key = jax.random.PRNGKey(0)
    k_params, k_x = jax.random.split(key)
    params = init_params(k_params, word_vocab_size, output_size)
    x_idx = jax.random.randint(k_x, (B, seq), 0, word_vocab_size, dtype=jnp.int32)

    out = base_model_forward(x_idx, params)
    jax.block_until_ready(out)

    assert out.shape == (B, output_size)

    # sanity 1: log-softmax rows exponentiate-sum to 1
    row_sums = jnp.sum(jnp.exp(out), axis=1)
    assert bool(jnp.all(jnp.abs(row_sums - 1.0) < 1e-4))

    # sanity 2: matches pure-JAX f32 reference within bf16-matmul tolerance
    ref = reference_forward(x_idx, params)
    assert bool(jnp.all(jnp.abs(out - ref) < 2e-2))

    print("KERNEL_OK")
</pallas_src>

<mosaic_0001>
module attributes {stable_mosaic.version = 11 : i64} {
  func.func @fused_mlp_kernel(%arg0: i32, %arg1: memref<6x128xi32, #tpu.memory_space<vmem>>, %arg2: memref<128x384xbf16, #tpu.memory_space<vmem>>, %arg3: memref<128x1xf32, #tpu.memory_space<vmem>>, %arg4: memref<16x128xbf16, #tpu.memory_space<vmem>>, %arg5: memref<16x1xf32, #tpu.memory_space<vmem>>, %arg6: memref<8x16xbf16, #tpu.memory_space<vmem>>, %arg7: memref<8x1xf32, #tpu.memory_space<vmem>>, %arg8: memref<8x128xf32, #tpu.memory_space<vmem>>) attributes {dimension_semantics = [#tpu.dimension_semantics<parallel>], iteration_bounds = array<i64: 1>, scalar_prefetch = 0 : i64, scratch_operands = 0 : i64, tpu.core_type = #tpu.core_type<tc>, window_params = [{transform_indices = @transform_0, window_bounds = array<i64: 6, 128>}, {pipeline_mode = #tpu.pipeline_mode<synchronous>, transform_indices = @transform_1, window_bounds = array<i64: 128, 384>}, {pipeline_mode = #tpu.pipeline_mode<synchronous>, transform_indices = @transform_2, window_bounds = array<i64: 128, 1>}, {pipeline_mode = #tpu.pipeline_mode<synchronous>, transform_indices = @transform_3, window_bounds = array<i64: 16, 128>}, {pipeline_mode = #tpu.pipeline_mode<synchronous>, transform_indices = @transform_4, window_bounds = array<i64: 16, 1>}, {pipeline_mode = #tpu.pipeline_mode<synchronous>, transform_indices = @transform_5, window_bounds = array<i64: 8, 16>}, {pipeline_mode = #tpu.pipeline_mode<synchronous>, transform_indices = @transform_6, window_bounds = array<i64: 8, 1>}, {transform_indices = @transform_7, window_bounds = array<i64: 8, 128>}]} {
    %0 = tpu.iota {dimensions = array<i32: 0>} : vector<64x128xi32>
    %c0 = arith.constant 0 : index
    %c0_0 = arith.constant 0 : index
    %1 = vector.load %arg1[%c0, %c0_0] : memref<6x128xi32, #tpu.memory_space<vmem>>, vector<1x128xi32>
    %2 = vector.broadcast %1 : vector<1x128xi32> to vector<64x128xi32>
    %3 = arith.cmpi eq, %2, %0 : vector<64x128xi32>
    %4 = arith.extui %3 : vector<64x128xi1> to vector<64x128xi32>
    %5 = arith.sitofp %4 : vector<64x128xi32> to vector<64x128xf32>
    %6 = arith.truncf %5 : vector<64x128xf32> to vector<64x128xbf16>
    %c1 = arith.constant 1 : index
    %c0_1 = arith.constant 0 : index
    %7 = vector.load %arg1[%c1, %c0_1] : memref<6x128xi32, #tpu.memory_space<vmem>>, vector<1x128xi32>
    %8 = vector.broadcast %7 : vector<1x128xi32> to vector<64x128xi32>
    %9 = arith.cmpi eq, %8, %0 : vector<64x128xi32>
    %10 = arith.extui %9 : vector<64x128xi1> to vector<64x128xi32>
    %11 = arith.sitofp %10 : vector<64x128xi32> to vector<64x128xf32>
    %12 = arith.truncf %11 : vector<64x128xf32> to vector<64x128xbf16>
    %c2 = arith.constant 2 : index
    %c0_2 = arith.constant 0 : index
    %13 = vector.load %arg1[%c2, %c0_2] : memref<6x128xi32, #tpu.memory_space<vmem>>, vector<1x128xi32>
    %14 = vector.broadcast %13 : vector<1x128xi32> to vector<64x128xi32>
    %15 = arith.cmpi eq, %14, %0 : vector<64x128xi32>
    %16 = arith.extui %15 : vector<64x128xi1> to vector<64x128xi32>
    %17 = arith.sitofp %16 : vector<64x128xi32> to vector<64x128xf32>
    %18 = arith.truncf %17 : vector<64x128xf32> to vector<64x128xbf16>
    %c3 = arith.constant 3 : index
    %c0_3 = arith.constant 0 : index
    %19 = vector.load %arg1[%c3, %c0_3] : memref<6x128xi32, #tpu.memory_space<vmem>>, vector<1x128xi32>
    %20 = vector.broadcast %19 : vector<1x128xi32> to vector<64x128xi32>
    %21 = arith.cmpi eq, %20, %0 : vector<64x128xi32>
    %22 = arith.extui %21 : vector<64x128xi1> to vector<64x128xi32>
    %23 = arith.sitofp %22 : vector<64x128xi32> to vector<64x128xf32>
    %24 = arith.truncf %23 : vector<64x128xf32> to vector<64x128xbf16>
    %c4 = arith.constant 4 : index
    %c0_4 = arith.constant 0 : index
    %25 = vector.load %arg1[%c4, %c0_4] : memref<6x128xi32, #tpu.memory_space<vmem>>, vector<1x128xi32>
    %26 = vector.broadcast %25 : vector<1x128xi32> to vector<64x128xi32>
    %27 = arith.cmpi eq, %26, %0 : vector<64x128xi32>
    %28 = arith.extui %27 : vector<64x128xi1> to vector<64x128xi32>
    %29 = arith.sitofp %28 : vector<64x128xi32> to vector<64x128xf32>
    %30 = arith.truncf %29 : vector<64x128xf32> to vector<64x128xbf16>
    %c5 = arith.constant 5 : index
    %c0_5 = arith.constant 0 : index
    %31 = vector.load %arg1[%c5, %c0_5] : memref<6x128xi32, #tpu.memory_space<vmem>>, vector<1x128xi32>
    %32 = vector.broadcast %31 : vector<1x128xi32> to vector<64x128xi32>
    %33 = arith.cmpi eq, %32, %0 : vector<64x128xi32>
    %34 = arith.extui %33 : vector<64x128xi1> to vector<64x128xi32>
    %35 = arith.sitofp %34 : vector<64x128xi32> to vector<64x128xf32>
    %36 = arith.truncf %35 : vector<64x128xf32> to vector<64x128xbf16>
    %37 = tpu.concatenate %6, %12, %18, %24, %30, %36 in 0 : vector<64x128xbf16>, vector<64x128xbf16>, vector<64x128xbf16>, vector<64x128xbf16>, vector<64x128xbf16>, vector<64x128xbf16> -> vector<384x128xbf16>
    %c0_6 = arith.constant 0 : index
    %c0_7 = arith.constant 0 : index
    %38 = vector.load %arg2[%c0_6, %c0_7] : memref<128x384xbf16, #tpu.memory_space<vmem>>, vector<128x384xbf16>
    %cst = arith.constant dense<0.000000e+00> : vector<128x128xf32>
    %39 = tpu.matmul %38, %37, %cst {dimension_numbers = #tpu.dot_dimension_numbers<[1], [0], [0], [1], [0, 0, 1, 1], [], []>} : vector<128x384xbf16>, vector<384x128xbf16>, vector<128x128xf32> -> vector<128x128xf32>
    %c0_8 = arith.constant 0 : index
    %c0_9 = arith.constant 0 : index
    %40 = vector.load %arg3[%c0_8, %c0_9] : memref<128x1xf32, #tpu.memory_space<vmem>>, vector<128x1xf32>
    %41 = vector.broadcast %40 : vector<128x1xf32> to vector<128x128xf32>
    %42 = arith.addf %39, %41 : vector<128x128xf32>
    %cst_10 = arith.constant 0.000000e+00 : f32
    %43 = vector.broadcast %cst_10 : f32 to vector<128x128xf32>
    %44 = arith.maximumf %42, %43 : vector<128x128xf32>
    %c0_11 = arith.constant 0 : index
    %c0_12 = arith.constant 0 : index
    %45 = vector.load %arg4[%c0_11, %c0_12] : memref<16x128xbf16, #tpu.memory_space<vmem>>, vector<16x128xbf16>
    %46 = arith.truncf %44 : vector<128x128xf32> to vector<128x128xbf16>
    %cst_13 = arith.constant dense<0.000000e+00> : vector<16x128xf32>
    %47 = tpu.matmul %45, %46, %cst_13 {dimension_numbers = #tpu.dot_dimension_numbers<[1], [0], [0], [1], [0, 0, 1, 1], [], []>} : vector<16x128xbf16>, vector<128x128xbf16>, vector<16x128xf32> -> vector<16x128xf32>
    %c0_14 = arith.constant 0 : index
    %c0_15 = arith.constant 0 : index
    %48 = vector.load %arg5[%c0_14, %c0_15] : memref<16x1xf32, #tpu.memory_space<vmem>>, vector<16x1xf32>
    %49 = vector.broadcast %48 : vector<16x1xf32> to vector<16x128xf32>
    %50 = arith.addf %47, %49 : vector<16x128xf32>
    %cst_16 = arith.constant 0.000000e+00 : f32
    %51 = vector.broadcast %cst_16 : f32 to vector<16x128xf32>
    %52 = arith.maximumf %50, %51 : vector<16x128xf32>
    %c0_17 = arith.constant 0 : index
    %c0_18 = arith.constant 0 : index
    %53 = vector.load %arg6[%c0_17, %c0_18] : memref<8x16xbf16, #tpu.memory_space<vmem>>, vector<8x16xbf16>
    %54 = arith.truncf %52 : vector<16x128xf32> to vector<16x128xbf16>
    %cst_19 = arith.constant dense<0.000000e+00> : vector<8x128xf32>
    %55 = tpu.matmul %53, %54, %cst_19 {dimension_numbers = #tpu.dot_dimension_numbers<[1], [0], [0], [1], [0, 0, 1, 1], [], []>} : vector<8x16xbf16>, vector<16x128xbf16>, vector<8x128xf32> -> vector<8x128xf32>
    %c0_20 = arith.constant 0 : index
    %c0_21 = arith.constant 0 : index
    %56 = vector.load %arg7[%c0_20, %c0_21] : memref<8x1xf32, #tpu.memory_space<vmem>>, vector<8x1xf32>
    %57 = vector.broadcast %56 : vector<8x1xf32> to vector<8x128xf32>
    %58 = arith.addf %55, %57 : vector<8x128xf32>
    %59 = tpu.iota {dimensions = array<i32: 0>} : vector<8x128xi32>
    %c8_i32 = arith.constant 8 : i32
    %60 = vector.broadcast %c8_i32 : i32 to vector<8x128xi32>
    %61 = arith.cmpi slt, %59, %60 : vector<8x128xi32>
    %cst_22 = arith.constant 0xFF800000 : f32
    %62 = vector.broadcast %cst_22 : f32 to vector<8x128xf32>
    %63 = arith.select %61, %58, %62 : vector<8x128xi1>, vector<8x128xf32>
    %cst_23 = arith.constant dense<0xFF800000> : vector<128xf32>
    %64 = vector.multi_reduction <maximumf>, %63, %cst_23 [0] : vector<8x128xf32> to vector<128xf32>
    %65 = vector.shape_cast %64 : vector<128xf32> to vector<1x128xf32>
    %66 = vector.broadcast %65 : vector<1x128xf32> to vector<8x128xf32>
    %67 = arith.subf %63, %66 : vector<8x128xf32>
    %68 = math.exp %67 : vector<8x128xf32>
    %cst_24 = arith.constant dense<0.000000e+00> : vector<128xf32>
    %69 = vector.multi_reduction <add>, %68, %cst_24 [0] : vector<8x128xf32> to vector<128xf32>
    %70 = vector.shape_cast %69 : vector<128xf32> to vector<1x128xf32>
    %71 = math.log %70 : vector<1x128xf32>
    %72 = arith.addf %65, %71 : vector<1x128xf32>
    %73 = vector.broadcast %72 : vector<1x128xf32> to vector<8x128xf32>
    %74 = arith.subf %63, %73 : vector<8x128xf32>
    %c0_25 = arith.constant 0 : index
    %c0_26 = arith.constant 0 : index
    %75 = vector.load %arg8[%c0_25, %c0_26] : memref<8x128xf32, #tpu.memory_space<vmem>>, vector<8x128xf32>
    tpu.vector_store %arg8[%c0_25, %c0_26], %74 {strides = array<i32>} : memref<8x128xf32, #tpu.memory_space<vmem>>, vector<8x128xf32>,
    return
  }
  func.func @transform_0(%arg0: i32) -> (i32, i32) {
    %c0_i32 = arith.constant 0 : i32
    %c0_i32_0 = arith.constant 0 : i32
    return %c0_i32, %arg0 : i32, i32
  }
  func.func @transform_1(%arg0: i32) -> (i32, i32) {
    %c0_i32 = arith.constant 0 : i32
    %c0_i32_0 = arith.constant 0 : i32
    %c0_i32_1 = arith.constant 0 : i32
    return %c0_i32, %c0_i32_0 : i32, i32
  }
  func.func @transform_2(%arg0: i32) -> (i32, i32) {
    %c0_i32 = arith.constant 0 : i32
    %c0_i32_0 = arith.constant 0 : i32
    %c0_i32_1 = arith.constant 0 : i32
    return %c0_i32, %c0_i32_0 : i32, i32
  }
  func.func @transform_3(%arg0: i32) -> (i32, i32) {
    %c0_i32 = arith.constant 0 : i32
    %c0_i32_0 = arith.constant 0 : i32
    %c0_i32_1 = arith.constant 0 : i32
    return %c0_i32, %c0_i32_0 : i32, i32
  }
  func.func @transform_4(%arg0: i32) -> (i32, i32) {
    %c0_i32 = arith.constant 0 : i32
    %c0_i32_0 = arith.constant 0 : i32
    %c0_i32_1 = arith.constant 0 : i32
    return %c0_i32, %c0_i32_0 : i32, i32
  }
  func.func @transform_5(%arg0: i32) -> (i32, i32) {
    %c0_i32 = arith.constant 0 : i32
    %c0_i32_0 = arith.constant 0 : i32
    %c0_i32_1 = arith.constant 0 : i32
    return %c0_i32, %c0_i32_0 : i32, i32
  }
  func.func @transform_6(%arg0: i32) -> (i32, i32) {
    %c0_i32 = arith.constant 0 : i32
    %c0_i32_0 = arith.constant 0 : i32
    %c0_i32_1 = arith.constant 0 : i32
    return %c0_i32, %c0_i32_0 : i32, i32
  }
  func.func @transform_7(%arg0: i32) -> (i32, i32) {
    %c0_i32 = arith.constant 0 : i32
    %c0_i32_0 = arith.constant 0 : i32
    return %c0_i32, %arg0 : i32, i32
  }
}

</mosaic_0001>

<llo_original>
// kernel: tpu_custom_call.1
$region0: #{tpu_custom_call.1}
  #allocation0 [shape = 'u32[]', space=smem, size = 0x4, offset = 0x4, fixed_abs, tag = 'smem constant byte address 0x4 - core index']
  #allocation1 [shape = 'u32[144,128]{1,0:T(1,128)}', space=vmem, size = 0x12000, scoped, tag = 'internal scratch']
  %s0 = inlined_call_operand.vmem [shape: s32[6,128], index: 0, kind: input, shape index: {}]
  %s1 = inlined_call_operand.hbm [shape: bf16[128,384], index: 1, kind: input, shape index: {}]
  %s2 = inlined_call_operand.vmem [shape: f32[128,1], index: 2, kind: input, shape index: {}]
  %s3 = inlined_call_operand.vmem [shape: bf16[16,128], index: 3, kind: input, shape index: {}]
  %s4 = inlined_call_operand.vmem [shape: f32[16,1], index: 4, kind: input, shape index: {}]
  %s5 = inlined_call_operand.vmem [shape: bf16[8,16], index: 5, kind: input, shape index: {}]
  %s6 = inlined_call_operand.vmem [shape: f32[8,1], index: 6, kind: input, shape index: {}]
  %s7 = inlined_call_operand.hbm [shape: f32[8,128], index: 7, kind: output, shape index: {}]
  %s8 = sld [smem:[#allocation0]]
  $region42: #{tpu_custom_call.1} parent=0
    _
  %s10 = ssub.s32 1, %s8
  %s11 = scalar_select 0, %s10, %s8
  $region1: #{tpu_custom_call.1} parent=0
    #allocation2 [shape = 'u8[98304]{0}', space=vmem, size = 0x18000, scoped, tag = 'input window, operand 1, single buffered']
    #allocation3 [shape = 's32[1]{0}', space=sflag, size = 0x4, scoped, tag = 'scoped memory for tpu_custom_call.1']
    #allocation4 [shape = 's32[1]{0}', space=sflag, size = 0x4, scoped, tag = 'scoped memory for tpu_custom_call.1']
    #allocation5 [shape = 'u8[4096]{0}', space=vmem, size = 0x1000, scoped, tag = 'output window, operand 0, single buffered']
    %12 = vsyncpa [#allocation3], 0
    %13 = vsyncpa [#allocation4], 0
    // Predicated region
    $region2: #{tpu_custom_call.1} parent=1 // pred_check
      _
    $region3: #{tpu_custom_call.1} parent=1 // pred_check_branch
      %15 = sbr.rel (0) target = $region5
    $region4: #{tpu_custom_call.1} parent=1 // pred_region
      _
    $region5: #{tpu_custom_call.1} parent=1 // pred_fallthru
      _
    // Predicated region
    $region6: #{tpu_custom_call.1} parent=1 // pred_check
      _
    $region7: #{tpu_custom_call.1} parent=1 // pred_check_branch
      %17 = sbr.rel (0) target = $region9
    $region8: #{tpu_custom_call.1} parent=1 // pred_region
      %s19 = ssub.s32 3072, 3072
      %20 = vsyncadd [#allocation3], %s19
      %s21 = sshll.u32 [#allocation2], 4
      %s22 = int_to_ptr.vmem [resolvable:$true] %s21
      %27 = dma.hbm_to_vmem [thread:$0]  %s1, 3072, %s22, [#allocation3], 192, 192, 12
    $region9: #{tpu_custom_call.1} parent=1 // pred_fallthru
      _
    // Predicated region
    $region10: #{tpu_custom_call.1} parent=1 // pred_check
      _
    $region11: #{tpu_custom_call.1} parent=1 // pred_check_branch
      %29 = sbr.rel (0) target = $region13
    $region12: #{tpu_custom_call.1} parent=1 // pred_region
      _
    $region13: #{tpu_custom_call.1} parent=1 // pred_fallthru
      _
    // Predicated region
    $region14: #{tpu_custom_call.1} parent=1 // pred_check
      _
    $region15: #{tpu_custom_call.1} parent=1 // pred_check_branch
      %31 = sbr.rel (0) target = $region17
    $region16: #{tpu_custom_call.1} parent=1 // pred_region
      _
    $region17: #{tpu_custom_call.1} parent=1 // pred_fallthru
      _
    // Predicated region
    $region18: #{tpu_custom_call.1} parent=1 // pred_check
      _
    $region19: #{tpu_custom_call.1} parent=1 // pred_check_branch
      %33 = sbr.rel (0) target = $region21
    $region20: #{tpu_custom_call.1} parent=1 // pred_region
      _
    $region21: #{tpu_custom_call.1} parent=1 // pred_fallthru
      _
    // Predicated region
    $region22: #{tpu_custom_call.1} parent=1 // pred_check
      _
    $region23: #{tpu_custom_call.1} parent=1 // pred_check_branch
      %35 = sbr.rel (0) target = $region25
    $region24: #{tpu_custom_call.1} parent=1 // pred_region
      _
    $region25: #{tpu_custom_call.1} parent=1 // pred_fallthru
      _
    // Predicated region
    $region26: #{tpu_custom_call.1} parent=1 // pred_check
      _
    $region27: #{tpu_custom_call.1} parent=1 // pred_check_branch
      %37 = sbr.rel (0) target = $region29
    $region28: #{tpu_custom_call.1} parent=1 // pred_region
      _
    $region29: #{tpu_custom_call.1} parent=1 // pred_fallthru
      _
    // Predicated region
    $region30: #{tpu_custom_call.1} parent=1 // pred_check
      _
    $region31: #{tpu_custom_call.1} parent=1 // pred_check_branch
      %39 = sbr.rel (0) target = $region33
    $region32: #{tpu_custom_call.1} parent=1 // pred_region
      %40 = dma.done [#allocation3], 3072
    $region33: #{tpu_custom_call.1} parent=1 // pred_fallthru
      _
    %v42 = vlaneseq
    %v43 = vshrl.u32 %v42, 7
    %v44 = vadd.s32 %v43, 8
    %v45 = vadd.s32 %v43, 16
    %v46 = vadd.s32 %v43, 24
    %v47 = vadd.s32 %v43, 32
    %v48 = vadd.s32 %v43, 40
    %v49 = vadd.s32 %v43, 48
    %v50 = vadd.s32 %v43, 56
    %v51 = vld [vmem:[%s0] sm:$0x1]
    %v52 = vlaneseq
    %v53 = vshrl.u32 %v52, 7
    %v54 = vsub.s32 0, %v53
    %v55 = vrot.slane %v51, %v54
    %vm56 = vcmp.eq.s32.totalorder %v55, %v43
    %vm57 = vcmp.eq.s32.totalorder %v55, %v44
    %vm58 = vcmp.eq.s32.totalorder %v55, %v45
    %vm59 = vcmp.eq.s32.totalorder %v55, %v46
    %vm60 = vcmp.eq.s32.totalorder %v55, %v47
    %vm61 = vcmp.eq.s32.totalorder %v55, %v48
    %vm62 = vcmp.eq.s32.totalorder %v55, %v49
    %vm63 = vcmp.eq.s32.totalorder %v55, %v50
    %v64 = vsel %vm56, 1, 0
    %v65 = vsel %vm57, 1, 0
    %v66 = vsel %vm58, 1, 0
    %v67 = vsel %vm59, 1, 0
    %v68 = vsel %vm60, 1, 0
    %v69 = vsel %vm61, 1, 0
    %v70 = vsel %vm62, 1, 0
    %v71 = vsel %vm63, 1, 0
    %v72 = vcvt.s32.f32 %v64
    %v73 = vcvt.s32.f32 %v65
    %v74 = vcvt.s32.f32 %v66
    %v75 = vcvt.s32.f32 %v67
    %v76 = vcvt.s32.f32 %v68
    %v77 = vcvt.s32.f32 %v69
    %v78 = vcvt.s32.f32 %v70
    %v79 = vcvt.s32.f32 %v71
    %v80 = vpack.c.bf16 %v73, %v72
    %v81 = vpack.c.bf16 %v75, %v74
    %v82 = vpack.c.bf16 %v77, %v76
    %v83 = vpack.c.bf16 %v79, %v78
    %v84 = vld [vmem:[%s0 + $0x1] sm:$0x1]
    %v85 = vlaneseq
    %v86 = vshrl.u32 %v85, 7
    %v87 = vsub.s32 0, %v86
    %v88 = vrot.slane %v84, %v87
    %vm89 = vcmp.eq.s32.totalorder %v88, %v43
    %vm90 = vcmp.eq.s32.totalorder %v88, %v44
    %vm91 = vcmp.eq.s32.totalorder %v88, %v45
    %vm92 = vcmp.eq.s32.totalorder %v88, %v46
    %vm93 = vcmp.eq.s32.totalorder %v88, %v47
    %vm94 = vcmp.eq.s32.totalorder %v88, %v48
    %vm95 = vcmp.eq.s32.totalorder %v88, %v49
    %vm96 = vcmp.eq.s32.totalorder %v88, %v50
    %v97 = vsel %vm89, 1, 0
    %v98 = vsel %vm90, 1, 0
    %v99 = vsel %vm91, 1, 0
    %v100 = vsel %vm92, 1, 0
    %v101 = vsel %vm93, 1, 0
    %v102 = vsel %vm94, 1, 0
    %v103 = vsel %vm95, 1, 0
    %v104 = vsel %vm96, 1, 0
    %v105 = vcvt.s32.f32 %v97
    %v106 = vcvt.s32.f32 %v98
    %v107 = vcvt.s32.f32 %v99
    %v108 = vcvt.s32.f32 %v100
    %v109 = vcvt.s32.f32 %v101
    %v110 = vcvt.s32.f32 %v102
    %v111 = vcvt.s32.f32 %v103
    %v112 = vcvt.s32.f32 %v104
    %v113 = vpack.c.bf16 %v106, %v105
    %v114 = vpack.c.bf16 %v108, %v107
    %v115 = vpack.c.bf16 %v110, %v109
    %v116 = vpack.c.bf16 %v112, %v111
    %v117 = vld [vmem:[%s0 + $0x2] sm:$0x1]
    %v118 = vlaneseq
    %v119 = vshrl.u32 %v118, 7
    %v120 = vsub.s32 0, %v119
    %v121 = vrot.slane %v117, %v120
    %vm122 = vcmp.eq.s32.totalorder %v121, %v43
    %vm123 = vcmp.eq.s32.totalorder %v121, %v44
    %vm124 = vcmp.eq.s32.totalorder %v121, %v45
    %vm125 = vcmp.eq.s32.totalorder %v121, %v46
    %vm126 = vcmp.eq.s32.totalorder %v121, %v47
    %vm127 = vcmp.eq.s32.totalorder %v121, %v48
    %vm128 = vcmp.eq.s32.totalorder %v121, %v49
    %vm129 = vcmp.eq.s32.totalorder %v121, %v50
    %v130 = vsel %vm122, 1, 0
    %v131 = vsel %vm123, 1, 0
    %v132 = vsel %vm124, 1, 0
    %v133 = vsel %vm125, 1, 0
    %v134 = vsel %vm126, 1, 0
    %v135 = vsel %vm127, 1, 0
    %v136 = vsel %vm128, 1, 0
    %v137 = vsel %vm129, 1, 0
    %v138 = vcvt.s32.f32 %v130
    %v139 = vcvt.s32.f32 %v131
    %v140 = vcvt.s32.f32 %v132
    %v141 = vcvt.s32.f32 %v133
    %v142 = vcvt.s32.f32 %v134
    %v143 = vcvt.s32.f32 %v135
    %v144 = vcvt.s32.f32 %v136
    %v145 = vcvt.s32.f32 %v137
    %v146 = vpack.c.bf16 %v139, %v138
    %v147 = vpack.c.bf16 %v141, %v140
    %v148 = vpack.c.bf16 %v143, %v142
    %v149 = vpack.c.bf16 %v145, %v144
    %v150 = vld [vmem:[%s0 + $0x3] sm:$0x1]
    %v151 = vlaneseq
    %v152 = vshrl.u32 %v151, 7
    %v153 = vsub.s32 0, %v152
    %v154 = vrot.slane %v150, %v153
    %vm155 = vcmp.eq.s32.totalorder %v154, %v43
    %vm156 = vcmp.eq.s32.totalorder %v154, %v44
    %vm157 = vcmp.eq.s32.totalorder %v154, %v45
    %vm158 = vcmp.eq.s32.totalorder %v154, %v46
    %vm159 = vcmp.eq.s32.totalorder %v154, %v47
    %vm160 = vcmp.eq.s32.totalorder %v154, %v48
    %vm161 = vcmp.eq.s32.totalorder %v154, %v49
    %vm162 = vcmp.eq.s32.totalorder %v154, %v50
    %v163 = vsel %vm155, 1, 0
    %v164 = vsel %vm156, 1, 0
    %v165 = vsel %vm157, 1, 0
    %v166 = vsel %vm158, 1, 0
    %v167 = vsel %vm159, 1, 0
    %v168 = vsel %vm160, 1, 0
    %v169 = vsel %vm161, 1, 0
    %v170 = vsel %vm162, 1, 0
    %v171 = vcvt.s32.f32 %v163
    %v172 = vcvt.s32.f32 %v164
    %v173 = vcvt.s32.f32 %v165
    %v174 = vcvt.s32.f32 %v166
    %v175 = vcvt.s32.f32 %v167
    %v176 = vcvt.s32.f32 %v168
    %v177 = vcvt.s32.f32 %v169
    %v178 = vcvt.s32.f32 %v170
    %v179 = vpack.c.bf16 %v172, %v171
    %v180 = vpack.c.bf16 %v174, %v173
    %v181 = vpack.c.bf16 %v176, %v175
    %v182 = vpack.c.bf16 %v178, %v177
    %v183 = vld [vmem:[%s0 + $0x4] sm:$0x1]
    %v184 = vlaneseq
    %v185 = vshrl.u32 %v184, 7
    %v186 = vsub.s32 0, %v185
    %v187 = vrot.slane %v183, %v186
    %vm188 = vcmp.eq.s32.totalorder %v187, %v43
    %vm189 = vcmp.eq.s32.totalorder %v187, %v44
    %vm190 = vcmp.eq.s32.totalorder %v187, %v45
    %vm191 = vcmp.eq.s32.totalorder %v187, %v46
    %vm192 = vcmp.eq.s32.totalorder %v187, %v47
    %vm193 = vcmp.eq.s32.totalorder %v187, %v48
    %vm194 = vcmp.eq.s32.totalorder %v187, %v49
    %vm195 = vcmp.eq.s32.totalorder %v187, %v50
    %v196 = vsel %vm188, 1, 0
    %v197 = vsel %vm189, 1, 0
    %v198 = vsel %vm190, 1, 0
    %v199 = vsel %vm191, 1, 0
    %v200 = vsel %vm192, 1, 0
    %v201 = vsel %vm193, 1, 0
    %v202 = vsel %vm194, 1, 0
    %v203 = vsel %vm195, 1, 0
    %v204 = vcvt.s32.f32 %v196
    %v205 = vcvt.s32.f32 %v197
    %v206 = vcvt.s32.f32 %v198
    %v207 = vcvt.s32.f32 %v199
    %v208 = vcvt.s32.f32 %v200
    %v209 = vcvt.s32.f32 %v201
    %v210 = vcvt.s32.f32 %v202
    %v211 = vcvt.s32.f32 %v203
    %v212 = vpack.c.bf16 %v205, %v204
    %v213 = vpack.c.bf16 %v207, %v206
    %v214 = vpack.c.bf16 %v209, %v208
    %v215 = vpack.c.bf16 %v211, %v210
    %v216 = vld [vmem:[%s0 + $0x5] sm:$0x1]
    %v217 = vlaneseq
    %v218 = vshrl.u32 %v217, 7
    %v219 = vsub.s32 0, %v218
    %v220 = vrot.slane %v216, %v219
    %vm221 = vcmp.eq.s32.totalorder %v220, %v43
    %vm222 = vcmp.eq.s32.totalorder %v220, %v44
    %vm223 = vcmp.eq.s32.totalorder %v220, %v45
    %vm224 = vcmp.eq.s32.totalorder %v220, %v46
    %vm225 = vcmp.eq.s32.totalorder %v220, %v47
    %vm226 = vcmp.eq.s32.totalorder %v220, %v48
    %vm227 = vcmp.eq.s32.totalorder %v220, %v49
    %vm228 = vcmp.eq.s32.totalorder %v220, %v50
    %v229 = vsel %vm221, 1, 0
    %v230 = vsel %vm222, 1, 0
    %v231 = vsel %vm223, 1, 0
    %v232 = vsel %vm224, 1, 0
    %v233 = vsel %vm225, 1, 0
    %v234 = vsel %vm226, 1, 0
    %v235 = vsel %vm227, 1, 0
    %v236 = vsel %vm228, 1, 0
    %v237 = vcvt.s32.f32 %v229
    %v238 = vcvt.s32.f32 %v230
    %v239 = vcvt.s32.f32 %v231
    %v240 = vcvt.s32.f32 %v232
    %v241 = vcvt.s32.f32 %v233
    %v242 = vcvt.s32.f32 %v234
    %v243 = vcvt.s32.f32 %v235
    %v244 = vcvt.s32.f32 %v236
    %v245 = vpack.c.bf16 %v238, %v237
    %v246 = vpack.c.bf16 %v240, %v239
    %v247 = vpack.c.bf16 %v242, %v241
    %v248 = vpack.c.bf16 %v244, %v243
    %v249 = vld [vmem:[#allocation2] sm:$0xff]
    %v250 = vld [vmem:[#allocation2 + $0x8] sm:$0xf]
    %v251 = vld [vmem:[#allocation2 + $0xc] sm:$0xff]
    %v252 = vld [vmem:[#allocation2 + $0x14] sm:$0xf]
    %v253 = vld [vmem:[#allocation2 + $0x18] sm:$0xff]
    %v254 = vld [vmem:[#allocation2 + $0x20] sm:$0xf]
    %v255 = vld [vmem:[#allocation2 + $0x24] sm:$0xff]
    %v256 = vld [vmem:[#allocation2 + $0x2c] sm:$0xf]
    %v257 = vld [vmem:[#allocation2 + $0x30] sm:$0xff]
    %v258 = vld [vmem:[#allocation2 + $0x38] sm:$0xf]
    %v259 = vld [vmem:[#allocation2 + $0x3c] sm:$0xff]
    %v260 = vld [vmem:[#allocation2 + $0x44] sm:$0xf]
    %v261 = vld [vmem:[#allocation2 + $0x48] sm:$0xff]
    %v262 = vld [vmem:[#allocation2 + $0x50] sm:$0xf]
    %v263 = vld [vmem:[#allocation2 + $0x54] sm:$0xff]
    %v264 = vld [vmem:[#allocation2 + $0x5c] sm:$0xf]
    %v265 = vld [vmem:[#allocation2 + $0x60] sm:$0xff]
    %v266 = vld [vmem:[#allocation2 + $0x68] sm:$0xf]
    %v267 = vld [vmem:[#allocation2 + $0x6c] sm:$0xff]
    %v268 = vld [vmem:[#allocation2 + $0x74] sm:$0xf]
    %v269 = vld [vmem:[#allocation2 + $0x78] sm:$0xff]
    %v270 = vld [vmem:[#allocation2 + $0x80] sm:$0xf]
    %v271 = vld [vmem:[#allocation2 + $0x84] sm:$0xff]
    %v272 = vld [vmem:[#allocation2 + $0x8c] sm:$0xf]
    %v273 = vld [vmem:[#allocation2 + $0x90] sm:$0xff]
    %v274 = vld [vmem:[#allocation2 + $0x98] sm:$0xf]
    %v275 = vld [vmem:[#allocation2 + $0x9c] sm:$0xff]
    %v276 = vld [vmem:[#allocation2 + $0xa4] sm:$0xf]
    %v277 = vld [vmem:[#allocation2 + $0xa8] sm:$0xff]
    %v278 = vld [vmem:[#allocation2 + $0xb0] sm:$0xf]
    %v279 = vld [vmem:[#allocation2 + $0xb4] sm:$0xff]
    %v280 = vld [vmem:[#allocation2 + $0xbc] sm:$0xf]
    %v281 = vld [vmem:[%s2] sm:$0xff]
    %v282 = vld [vmem:[%s2 + $0x8] sm:$0xff]
    %v283 = vld [vmem:[%s2 + $0x10] sm:$0xff]
    %v284 = vld [vmem:[%s2 + $0x18] sm:$0xff]
    %v285 = vld [vmem:[%s2 + $0x20] sm:$0xff]
    %v286 = vld [vmem:[%s2 + $0x28] sm:$0xff]
    %v287 = vld [vmem:[%s2 + $0x30] sm:$0xff]
    %v288 = vld [vmem:[%s2 + $0x38] sm:$0xff]
    %v289 = vld [vmem:[%s2 + $0x40] sm:$0xff]
    %v290 = vld [vmem:[%s2 + $0x48] sm:$0xff]
    %v291 = vld [vmem:[%s2 + $0x50] sm:$0xff]
    %v292 = vld [vmem:[%s2 + $0x58] sm:$0xff]
    %v293 = vld [vmem:[%s2 + $0x60] sm:$0xff]
    %v294 = vld [vmem:[%s2 + $0x68] sm:$0xff]
    %v295 = vld [vmem:[%s2 + $0x70] sm:$0xff]
    %v296 = vld [vmem:[%s2 + $0x78] sm:$0xff]
    %298 = vset.pattern.permute.xlu0 0
    %299 = vperm.xlu0 %298, %v281
    %v300 = vpop.permute.xlu0 %299
    %303 = vset.pattern.permute.xlu0 0
    %304 = vperm.xlu0 %303, %v282
    %v305 = vpop.permute.xlu0 %304
    %308 = vset.pattern.permute.xlu0 0
    %309 = vperm.xlu0 %308, %v283
    %v310 = vpop.permute.xlu0 %309
    %313 = vset.pattern.permute.xlu0 0
    %314 = vperm.xlu0 %313, %v284
    %v315 = vpop.permute.xlu0 %314
    %318 = vset.pattern.permute.xlu0 0
    %319 = vperm.xlu0 %318, %v285
    %v320 = vpop.permute.xlu0 %319
    %323 = vset.pattern.permute.xlu0 0
    %324 = vperm.xlu0 %323, %v286
    %v325 = vpop.permute.xlu0 %324
    %328 = vset.pattern.permute.xlu0 0
    %329 = vperm.xlu0 %328, %v287
    %v330 = vpop.permute.xlu0 %329
    %333 = vset.pattern.permute.xlu0 0
    %334 = vperm.xlu0 %333, %v288
    %v335 = vpop.permute.xlu0 %334
    %338 = vset.pattern.permute.xlu0 0
    %339 = vperm.xlu0 %338, %v289
    %v340 = vpop.permute.xlu0 %339
    %343 = vset.pattern.permute.xlu0 0
    %344 = vperm.xlu0 %343, %v290
    %v345 = vpop.permute.xlu0 %344
    %348 = vset.pattern.permute.xlu0 0
    %349 = vperm.xlu0 %348, %v291
    %v350 = vpop.permute.xlu0 %349
    %353 = vset.pattern.permute.xlu0 0
    %354 = vperm.xlu0 %353, %v292
    %v355 = vpop.permute.xlu0 %354
    %358 = vset.pattern.permute.xlu0 0
    %359 = vperm.xlu0 %358, %v293
    %v360 = vpop.permute.xlu0 %359
    %363 = vset.pattern.permute.xlu0 0
    %364 = vperm.xlu0 %363, %v294
    %v365 = vpop.permute.xlu0 %364
    %368 = vset.pattern.permute.xlu0 0
    %369 = vperm.xlu0 %368, %v295
    %v370 = vpop.permute.xlu0 %369
    %373 = vset.pattern.permute.xlu0 0
    %374 = vperm.xlu0 %373, %v296
    %v375 = vpop.permute.xlu0 %374
    %v409 = vunpack.c.l.b16 %v249
    %v410 = vunpack.c.h.b16 %v249
    %v411 = vunpack.c.l.b16 %v250
    %v412 = vunpack.c.l.b16 %v251
    %v413 = vunpack.c.h.b16 %v251
    %v414 = vunpack.c.l.b16 %v252
    %v415 = vunpack.c.l.b16 %v253
    %v416 = vunpack.c.h.b16 %v253
    %v417 = vunpack.c.l.b16 %v254
    %v418 = vunpack.c.l.b16 %v255
    %v419 = vunpack.c.h.b16 %v255
    %v420 = vunpack.c.l.b16 %v256
    %v421 = vunpack.c.l.b16 %v257
    %v422 = vunpack.c.h.b16 %v257
    %v423 = vunpack.c.l.b16 %v258
    %v424 = vunpack.c.l.b16 %v259
    %v425 = vunpack.c.h.b16 %v259
    %v426 = vunpack.c.l.b16 %v260
    %v427 = vunpack.c.l.b16 %v261
    %v428 = vunpack.c.h.b16 %v261
    %v429 = vunpack.c.l.b16 %v262
    %v430 = vunpack.c.l.b16 %v263
    %v431 = vunpack.c.h.b16 %v263
    %v432 = vunpack.c.l.b16 %v264
    %v433 = vunpack.c.l.b16 %v265
    %v434 = vunpack.c.h.b16 %v265
    %v435 = vunpack.c.l.b16 %v266
    %v436 = vunpack.c.l.b16 %v267
    %v437 = vunpack.c.h.b16 %v267
    %v438 = vunpack.c.l.b16 %v268
    %v439 = vunpack.c.l.b16 %v269
    %v440 = vunpack.c.h.b16 %v269
    %v441 = vunpack.c.l.b16 %v270
    %v442 = vunpack.c.l.b16 %v271
    %v443 = vunpack.c.h.b16 %v271
    %v444 = vunpack.c.l.b16 %v272
    %v445 = vunpack.c.l.b16 %v273
    %v446 = vunpack.c.h.b16 %v273
    %v447 = vunpack.c.l.b16 %v274
    %v448 = vunpack.c.l.b16 %v275
    %v449 = vunpack.c.h.b16 %v275
    %v450 = vunpack.c.l.b16 %v276
    %v451 = vunpack.c.l.b16 %v277
    %v452 = vunpack.c.h.b16 %v277
    %v453 = vunpack.c.l.b16 %v278
    %v454 = vunpack.c.l.b16 %v279
    %v455 = vunpack.c.h.b16 %v279
    %v456 = vunpack.c.l.b16 %v280
    %v457 = vpack.c.b16 %v412, %v409
    %v458 = vpack.c.b16 %v413, %v410
    %v459 = vpack.c.b16 %v414, %v411
    %v460 = vpack.c.b16 %v418, %v415
    %v461 = vpack.c.b16 %v419, %v416
    %v462 = vpack.c.b16 %v420, %v417
    %v463 = vpack.c.b16 %v424, %v421
    %v464 = vpack.c.b16 %v425, %v422
    %v465 = vpack.c.b16 %v426, %v423
    %v466 = vpack.c.b16 %v430, %v427
    %v467 = vpack.c.b16 %v431, %v428
    %v468 = vpack.c.b16 %v432, %v429
    %v469 = vpack.c.b16 %v436, %v433
    %v470 = vpack.c.b16 %v437, %v434
    %v471 = vpack.c.b16 %v438, %v435
    %v472 = vpack.c.b16 %v442, %v439
    %v473 = vpack.c.b16 %v443, %v440
    %v474 = vpack.c.b16 %v444, %v441
    %v475 = vpack.c.b16 %v448, %v445
    %v476 = vpack.c.b16 %v449, %v446
    %v477 = vpack.c.b16 %v450, %v447
    %v478 = vpack.c.b16 %v454, %v451
    %v479 = vpack.c.b16 %v455, %v452
    %v480 = vpack.c.b16 %v456, %v453
    %505 = vmatprep.subr.bf16.mxu0 0
    %506 = vmatpush1.bf16.msra.mxu0 %v116
    %507 = vmatprep.subr.bf16.mxu0 0
    %508 = vmatpush1.bf16.msra.mxu0 %v115
    %509 = vmatprep.subr.bf16.mxu0 0
    %510 = vmatpush1.bf16.msra.mxu0 %v114
    %511 = vmatprep.subr.bf16.mxu0 0
    %512 = vmatpush1.bf16.msra.mxu0 %v113
    %513 = vmatprep.subr.bf16.mxu0 0
    %514 = vmatpush1.bf16.msra.mxu0 %v83
    %515 = vmatprep.subr.bf16.mxu0 0
    %516 = vmatpush1.bf16.msra.mxu0 %v82
    %517 = vmatprep.subr.bf16.mxu0 0
    %518 = vmatpush1.bf16.msra.mxu0 %v81
    %519 = vmatprep.subr.bf16.mxu0 0
    %520 = vmatpush1.bf16.msra.mxu0 %v80
    %521 = vmatprep.subr.bf16.mxu0 0
    %522 = vmatpush2.bf16.msra.mxu0 %v182
    %523 = vmatprep.subr.bf16.mxu0 0
    %524 = vmatpush2.bf16.msra.mxu0 %v181
    %525 = vmatprep.subr.bf16.mxu0 0
    %526 = vmatpush2.bf16.msra.mxu0 %v180
    %527 = vmatprep.subr.bf16.mxu0 0
    %528 = vmatpush2.bf16.msra.mxu0 %v179
    %529 = vmatprep.subr.bf16.mxu0 0
    %530 = vmatpush2.bf16.msra.mxu0 %v149
    %531 = vmatprep.subr.bf16.mxu0 0
    %532 = vmatpush2.bf16.msra.mxu0 %v148
    %533 = vmatprep.subr.bf16.mxu0 0
    %534 = vmatpush2.bf16.msra.mxu0 %v147
    %535 = vmatprep.subr.bf16.mxu0 0
    %536 = vmatpush2.bf16.msra.mxu0 %v146
    %537 = vmatprep.mubr.bf16.mxu0 %v458
    %538 = vmatmul.mubr.bf16.gmra.mxu0 %v457
    %v539 = vpop.f32.mrf.mxu0
    %v540 = vadd.f32 %v300, %v539
    %v541 = vpop.f32.mrf.mxu0
    %v542 = vpop.f32.mrf.mxu0
    %v543 = vadd.f32 %v305, %v542
    %v544 = vpop.f32.mrf.mxu0
    %545 = vmatprep.mubr.bf16.mxu0 %v461
    %546 = vmatmul.mubr.bf16.gmra.mxu0 %v460
    %v547 = vpop.f32.mrf.mxu0
    %v548 = vadd.f32 %v310, %v547
    %v549 = vpop.f32.mrf.mxu0
    %v550 = vpop.f32.mrf.mxu0
    %v551 = vadd.f32 %v315, %v550
    %v552 = vpop.f32.mrf.mxu0
    %553 = vmatprep.mubr.bf16.mxu0 %v464
    %554 = vmatmul.mubr.bf16.gmra.mxu0 %v463
    %v555 = vpop.f32.mrf.mxu0
    %v556 = vadd.f32 %v320, %v555
    %v557 = vpop.f32.mrf.mxu0
    %v558 = vpop.f32.mrf.mxu0
    %v559 = vadd.f32 %v325, %v558
    %v560 = vpop.f32.mrf.mxu0
    %561 = vmatprep.mubr.bf16.mxu0 %v467
    %562 = vmatmul.mubr.bf16.gmra.mxu0 %v466
    %v563 = vpop.f32.mrf.mxu0
    %v564 = vadd.f32 %v330, %v563
    %v565 = vpop.f32.mrf.mxu0
    %v566 = vpop.f32.mrf.mxu0
    %v567 = vadd.f32 %v335, %v566
    %v568 = vpop.f32.mrf.mxu0
    %569 = vmatprep.mubr.bf16.mxu0 %v470
    %570 = vmatmul.mubr.bf16.gmra.mxu0 %v469
    %v571 = vpop.f32.mrf.mxu0
    %v572 = vadd.f32 %v340, %v571
    %v573 = vpop.f32.mrf.mxu0
    %v574 = vpop.f32.mrf.mxu0
    %v575 = vadd.f32 %v345, %v574
    %v576 = vpop.f32.mrf.mxu0
    %577 = vmatprep.mubr.bf16.mxu0 %v473
    %578 = vmatmul.mubr.bf16.gmra.mxu0 %v472
    %v579 = vpop.f32.mrf.mxu0
    %v580 = vadd.f32 %v350, %v579
    %v581 = vpop.f32.mrf.mxu0
    %v582 = vpop.f32.mrf.mxu0
    %v583 = vadd.f32 %v355, %v582
    %v584 = vpop.f32.mrf.mxu0
    %585 = vmatprep.mubr.bf16.mxu0 %v476
    %586 = vmatmul.mubr.bf16.gmra.mxu0 %v475
    %v587 = vpop.f32.mrf.mxu0
    %v588 = vadd.f32 %v360, %v587
    %v589 = vpop.f32.mrf.mxu0
    %v590 = vpop.f32.mrf.mxu0
    %v591 = vadd.f32 %v365, %v590
    %v592 = vpop.f32.mrf.mxu0
    %593 = vmatprep.mubr.bf16.mxu0 %v479
    %594 = vmatmul.mubr.bf16.gmra.mxu0 %v478
    %v595 = vpop.f32.mrf.mxu0
    %v596 = vadd.f32 %v370, %v595
    %v597 = vpop.f32.mrf.mxu0
    %v598 = vpop.f32.mrf.mxu0
    %v599 = vadd.f32 %v375, %v598
    %v600 = vpop.f32.mrf.mxu0
    %601 = vdwg.mxu0
    %602 = vmatprep.subr.bf16.mxu0 0
    %603 = vmatpush1.bf16.msra.mxu0 %v248
    %604 = vmatprep.subr.bf16.mxu0 0
    %605 = vmatpush1.bf16.msra.mxu0 %v247
    %606 = vmatprep.subr.bf16.mxu0 0
    %607 = vmatpush1.bf16.msra.mxu0 %v246
    %608 = vmatprep.subr.bf16.mxu0 0
    %609 = vmatpush1.bf16.msra.mxu0 %v245
    %610 = vmatprep.subr.bf16.mxu0 0
    %611 = vmatpush1.bf16.msra.mxu0 %v215
    %612 = vmatprep.subr.bf16.mxu0 0
    %613 = vmatpush1.bf16.msra.mxu0 %v214
    %614 = vmatprep.subr.bf16.mxu0 0
    %615 = vmatpush1.bf16.msra.mxu0 %v213
    %616 = vmatprep.subr.bf16.mxu0 0
    %617 = vmatpush1.bf16.msra.mxu0 %v212
    %618 = vmatprep.subr.bf16.mxu0 0
    %619 = vmatpush2.bf16.msra.mxu0 0
    %620 = vmatprep.subr.bf16.mxu0 0
    %621 = vmatpush2.bf16.msra.mxu0 0
    %622 = vmatprep.subr.bf16.mxu0 0
    %623 = vmatpush2.bf16.msra.mxu0 0
    %624 = vmatprep.subr.bf16.mxu0 0
    %625 = vmatpush2.bf16.msra.mxu0 0
    %626 = vmatprep.subr.bf16.mxu0 0
    %627 = vmatpush2.bf16.msra.mxu0 0
    %628 = vmatprep.subr.bf16.mxu0 0
    %629 = vmatpush2.bf16.msra.mxu0 0
    %630 = vmatprep.subr.bf16.mxu0 0
    %631 = vmatpush2.bf16.msra.mxu0 0
    %632 = vmatprep.subr.bf16.mxu0 0
    %633 = vmatpush2.bf16.msra.mxu0 0
    %634 = vmatprep.mubr.bf16.mxu0 0
    %635 = vmatmul.mubr.bf16.gmra.mxu0 %v459
    %v636 = vpop.f32.mrf.mxu0
    %v637 = vadd.f32 %v540, %v636
    %v638 = vpop.f32.mrf.mxu0
    %v639 = vpop.f32.mrf.mxu0
    %v640 = vadd.f32 %v543, %v639
    %v641 = vpop.f32.mrf.mxu0
    %642 = vmatprep.mubr.bf16.mxu0 0
    %643 = vmatmul.mubr.bf16.gmra.mxu0 %v462
    %v644 = vpop.f32.mrf.mxu0
    %v645 = vadd.f32 %v548, %v644
    %v646 = vpop.f32.mrf.mxu0
    %v647 = vpop.f32.mrf.mxu0
    %v648 = vadd.f32 %v551, %v647
    %v649 = vpop.f32.mrf.mxu0
    %650 = vmatprep.mubr.bf16.mxu0 0
    %651 = vmatmul.mubr.bf16.gmra.mxu0 %v465
    %v652 = vpop.f32.mrf.mxu0
    %v653 = vadd.f32 %v556, %v652
    %v654 = vpop.f32.mrf.mxu0
    %v655 = vpop.f32.mrf.mxu0
    %v656 = vadd.f32 %v559, %v655
    %v657 = vpop.f32.mrf.mxu0
    %658 = vmatprep.mubr.bf16.mxu0 0
    %659 = vmatmul.mubr.bf16.gmra.mxu0 %v468
    %v660 = vpop.f32.mrf.mxu0
    %v661 = vadd.f32 %v564, %v660
    %v662 = vpop.f32.mrf.mxu0
    %v663 = vpop.f32.mrf.mxu0
    %v664 = vadd.f32 %v567, %v663
    %v665 = vpop.f32.mrf.mxu0
    %666 = vmatprep.mubr.bf16.mxu0 0
    %667 = vmatmul.mubr.bf16.gmra.mxu0 %v471
    %v668 = vpop.f32.mrf.mxu0
    %v669 = vadd.f32 %v572, %v668
    %v670 = vpop.f32.mrf.mxu0
    %v671 = vpop.f32.mrf.mxu0
    %v672 = vadd.f32 %v575, %v671
    %v673 = vpop.f32.mrf.mxu0
    %674 = vmatprep.mubr.bf16.mxu0 0
    %675 = vmatmul.mubr.bf16.gmra.mxu0 %v474
    %v676 = vpop.f32.mrf.mxu0
    %v677 = vadd.f32 %v580, %v676
    %v678 = vpop.f32.mrf.mxu0
    %v679 = vpop.f32.mrf.mxu0
    %v680 = vadd.f32 %v583, %v679
    %v681 = vpop.f32.mrf.mxu0
    %682 = vmatprep.mubr.bf16.mxu0 0
    %683 = vmatmul.mubr.bf16.gmra.mxu0 %v477
    %v684 = vpop.f32.mrf.mxu0
    %v685 = vadd.f32 %v588, %v684
    %v686 = vpop.f32.mrf.mxu0
    %v687 = vpop.f32.mrf.mxu0
    %v688 = vadd.f32 %v591, %v687
    %v689 = vpop.f32.mrf.mxu0
    %690 = vmatprep.mubr.bf16.mxu0 0
    %691 = vmatmul.mubr.bf16.gmra.mxu0 %v480
    %v692 = vpop.f32.mrf.mxu0
    %v693 = vadd.f32 %v596, %v692
    %v694 = vpop.f32.mrf.mxu0
    %v695 = vpop.f32.mrf.mxu0
    %v696 = vadd.f32 %v599, %v695
    %v697 = vpop.f32.mrf.mxu0
    %698 = vdwg.mxu0
    %v699 = vmax.f32 %v637, 0.0
    %v700 = vmax.f32 %v640, 0.0
    %v701 = vmax.f32 %v645, 0.0
    %v702 = vmax.f32 %v648, 0.0
    %v703 = vmax.f32 %v653, 0.0
    %v704 = vmax.f32 %v656, 0.0
    %v705 = vmax.f32 %v661, 0.0
    %v706 = vmax.f32 %v664, 0.0
    %v707 = vmax.f32 %v669, 0.0
    %v708 = vmax.f32 %v672, 0.0
    %v709 = vmax.f32 %v677, 0.0
    %v710 = vmax.f32 %v680, 0.0
    %v711 = vmax.f32 %v685, 0.0
    %v712 = vmax.f32 %v688, 0.0
    %v713 = vmax.f32 %v693, 0.0
    %v714 = vmax.f32 %v696, 0.0
    %v715 = vld [vmem:[%s3] sm:$0xf]
    %v716 = vld [vmem:[%s3 + $0x4] sm:$0xf]
    %v717 = vpack.c.bf16 %v700, %v699
    %v718 = vpack.c.bf16 %v702, %v701
    %v719 = vpack.c.bf16 %v704, %v703
    %v720 = vpack.c.bf16 %v706, %v705
    %v721 = vpack.c.bf16 %v708, %v707
    %v722 = vpack.c.bf16 %v710, %v709
    %v723 = vpack.c.bf16 %v712, %v711
    %v724 = vpack.c.bf16 %v714, %v713
    %v725 = vld [vmem:[%s4] sm:$0xff]
    %v726 = vld [vmem:[%s4 + $0x8] sm:$0xff]
    %728 = vset.pattern.permute.xlu0 0
    %729 = vperm.xlu0 %728, %v725
    %v730 = vpop.permute.xlu0 %729
    %733 = vset.pattern.permute.xlu0 0
    %734 = vperm.xlu0 %733, %v726
    %v735 = vpop.permute.xlu0 %734
    %v739 = vunpack.c.l.b16 %v715
    %v740 = vunpack.c.l.b16 %v716
    %v741 = vpack.c.b16 %v740, %v739
    %743 = vmatprep.subr.bf16.mxu0 0
    %744 = vmatpush1.bf16.msra.mxu0 %v724
    %745 = vmatprep.subr.bf16.mxu0 0
    %746 = vmatpush1.bf16.msra.mxu0 %v723
    %747 = vmatprep.subr.bf16.mxu0 0
    %748 = vmatpush1.bf16.msra.mxu0 %v722
    %749 = vmatprep.subr.bf16.mxu0 0
    %750 = vmatpush1.bf16.msra.mxu0 %v721
    %751 = vmatprep.subr.bf16.mxu0 0
    %752 = vmatpush1.bf16.msra.mxu0 %v720
    %753 = vmatprep.subr.bf16.mxu0 0
    %754 = vmatpush1.bf16.msra.mxu0 %v719
    %755 = vmatprep.subr.bf16.mxu0 0
    %756 = vmatpush1.bf16.msra.mxu0 %v718
    %757 = vmatprep.subr.bf16.mxu0 0
    %758 = vmatpush1.bf16.msra.mxu0 %v717
    %759 = vmatprep.subr.bf16.mxu0 0
    %760 = vmatpush2.bf16.msra.mxu0 0
    %761 = vmatprep.subr.bf16.mxu0 0
    %762 = vmatpush2.bf16.msra.mxu0 0
    %763 = vmatprep.subr.bf16.mxu0 0
    %764 = vmatpush2.bf16.msra.mxu0 0
    %765 = vmatprep.subr.bf16.mxu0 0
    %766 = vmatpush2.bf16.msra.mxu0 0
    %767 = vmatprep.subr.bf16.mxu0 0
    %768 = vmatpush2.bf16.msra.mxu0 0
    %769 = vmatprep.subr.bf16.mxu0 0
    %770 = vmatpush2.bf16.msra.mxu0 0
    %771 = vmatprep.subr.bf16.mxu0 0
    %772 = vmatpush2.bf16.msra.mxu0 0
    %773 = vmatprep.subr.bf16.mxu0 0
    %774 = vmatpush2.bf16.msra.mxu0 0
    %775 = vmatprep.mubr.bf16.mxu0 0
    %776 = vmatmul.mubr.bf16.gmra.mxu0 %v741
    %v777 = vpop.f32.mrf.mxu0
    %v778 = vadd.f32 %v730, %v777
    %v779 = vpop.f32.mrf.mxu0
    %v780 = vpop.f32.mrf.mxu0
    %v781 = vadd.f32 %v735, %v780
    %v782 = vpop.f32.mrf.mxu0
    %783 = vdwg.mxu0
    %v784 = vmax.f32 %v778, 0.0
    %v785 = vmax.f32 %v781, 0.0
    %v786 = vld [vmem:[%s5] sm:$0xf]
    %v787 = vpack.c.bf16 %v785, %v784
    %v788 = vld [vmem:[%s6] sm:$0xff]
    %790 = vset.pattern.permute.xlu0 0
    %791 = vperm.xlu0 %790, %v788
    %v792 = vpop.permute.xlu0 %791
    %vm794 = vcmask 130048
    %v796 = vsel %vm794, %v786, 0
    %798 = vmatprep.subr.bf16.mxu0 0
    %799 = vmatpush1.bf16.msra.mxu0 0
    %800 = vmatprep.subr.bf16.mxu0 0
    %801 = vmatpush1.bf16.msra.mxu0 0
    %802 = vmatprep.subr.bf16.mxu0 0
    %803 = vmatpush1.bf16.msra.mxu0 0
    %804 = vmatprep.subr.bf16.mxu0 0
    %805 = vmatpush1.bf16.msra.mxu0 0
    %806 = vmatprep.subr.bf16.mxu0 0
    %807 = vmatpush1.bf16.msra.mxu0 0
    %808 = vmatprep.subr.bf16.mxu0 0
    %809 = vmatpush1.bf16.msra.mxu0 0
    %810 = vmatprep.subr.bf16.mxu0 0
    %811 = vmatpush1.bf16.msra.mxu0 0
    %812 = vmatprep.subr.bf16.mxu0 0
    %813 = vmatpush1.bf16.msra.mxu0 %v787
    %814 = vmatprep.subr.bf16.mxu0 0
    %815 = vmatpush2.bf16.msra.mxu0 0
    %816 = vmatprep.subr.bf16.mxu0 0
    %817 = vmatpush2.bf16.msra.mxu0 0
    %818 = vmatprep.subr.bf16.mxu0 0
    %819 = vmatpush2.bf16.msra.mxu0 0
    %820 = vmatprep.subr.bf16.mxu0 0
    %821 = vmatpush2.bf16.msra.mxu0 0
    %822 = vmatprep.subr.bf16.mxu0 0
    %823 = vmatpush2.bf16.msra.mxu0 0
    %824 = vmatprep.subr.bf16.mxu0 0
    %825 = vmatpush2.bf16.msra.mxu0 0
    %826 = vmatprep.subr.bf16.mxu0 0
    %827 = vmatpush2.bf16.msra.mxu0 0
    %828 = vmatprep.subr.bf16.mxu0 0
    %829 = vmatpush2.bf16.msra.mxu0 0
    %830 = vmatprep.mubr.bf16.mxu0 0
    %831 = vmatmul.mubr.bf16.gmra.mxu0 %v796
    %v832 = vpop.f32.mrf.mxu0
    %v833 = vadd.f32 %v792, %v832
    %v834 = vpop.f32.mrf.mxu0
    %v835 = vpop.f32.mrf.mxu0
    %v836 = vpop.f32.mrf.mxu0
    %837 = vdwg.mxu0
    %vm838 = vcmp.lt.s32.totalorder %v43, 8
    %v839 = vsel %vm838, %v833, -inf
    %v840 = vrot.slane %v839, 4
    %v841 = vmax.f32 %v839, %v840
    %v842 = vrot.slane %v841, 2
    %v843 = vmax.f32 %v841, %v842
    %v844 = vrot.slane %v843, 1
    %v845 = vmax.f32 %v843, %v844
    %v846 = vsub.f32 %v839, %v845
    %v847 = vmul.f32 %v846, 1.442695
    %v848 = vpow.pop %v847
    %v849 = vrot.slane %v848, 4
    %v850 = vadd.f32 %v848, %v849
    %v851 = vrot.slane %v850, 2
    %v852 = vadd.f32 %v850, %v851
    %v853 = vrot.slane %v852, 1
    %v854 = vadd.f32 %v852, %v853
    %v855 = vlog2.pop %v854
    %v856 = vmul.f32 %v855, 0.6931472
    %v857 = vadd.f32 %v845, %v856
    %v858 = vsub.f32 %v839, %v857
    %859 = vst [vmem:[#allocation5] sm:$0xff] %v858
    // Predicated region
    $region34: #{tpu_custom_call.1} parent=1 // pred_check
      _
    $region35: #{tpu_custom_call.1} parent=1 // pred_check_branch
      %861 = sbr.rel (0) target = $region37
    $region36: #{tpu_custom_call.1} parent=1 // pred_region
      %s863 = ssub.s32 128, 128
      %864 = vsyncadd [#allocation4], %s863
      %s866 = sshll.u32 [#allocation5], 4
      %s867 = int_to_ptr.vmem [resolvable:$true] %s866
      %869 = dma.vmem_to_hbm [thread:$0]  %s867, 128, %s7, [#allocation4]
    $region37: #{tpu_custom_call.1} parent=1 // pred_fallthru
      _
    // Predicated region
    $region38: #{tpu_custom_call.1} parent=1 // pred_check
      _
    $region39: #{tpu_custom_call.1} parent=1 // pred_check_branch
      %871 = sbr.rel (0) target = $region41
    $region40: #{tpu_custom_call.1} parent=1 // pred_region
      %872 = dma.done [#allocation4], 128
    $region41: #{tpu_custom_call.1} parent=1 // pred_fallthru
      _
    %873 = vsyncpa [#allocation3], 1
    %874 = vsyncpa [#allocation4], 1

</llo_original>
